<compile_context>
chip_gen: v6e
topology: v6e:2x2x1
jax: 0.10.0
libtpu: 0.0.40
codegen_flags: <defaults>
</compile_context>

<pallas_src>
import jax
import jax.numpy as jnp
from jax.experimental import pallas as pl
from jax.experimental.pallas import tpu as pltpu

# Small, self-chosen hyperparameters consistent with the module structure.
INPUT_DIM = 32
HIDDEN_1 = 64
HIDDEN_2 = 48
HIDDEN_3 = 32
OUTPUT_DIM = 8
BATCH = 8
BN_EPS = 1e-5

PAD = 128          # lane-dense feature width used inside the kernel
N_LAYERS = 4       # 4 linear layers; layers 0..2 are followed by BN + ReLU

DIMS = [INPUT_DIM, HIDDEN_1, HIDDEN_2, HIDDEN_3, OUTPUT_DIM]


# ---------------------------------------------------------------------------
# Kernel
# ---------------------------------------------------------------------------
def mlp_kernel(x_ref, w_ref, aff_ref, o_ref):
    """x_ref: [B, 128] f32, w_ref: [4, 128, 128] bf16,
    aff_ref: [4, 8, 128] f32 (row 0 = bias, 1 = gamma, 2 = beta), o_ref: [B, 128] f32."""

    def linear(h, l):
        # bf16 operands, f32 accumulation on the MXU.
        return (
            jnp.dot(h.astype(jnp.bfloat16), w_ref[l],
                    preferred_element_type=jnp.float32)
            + aff_ref[l, 0:1, :]
        )

    def bn_relu(h, l):
        # Fused BatchNorm (training-mode batch stats, biased var) + ReLU.
        gamma = aff_ref[l, 1:2, :]
        beta = aff_ref[l, 2:3, :]
        mu = jnp.mean(h, axis=0, keepdims=True)
        var = jnp.maximum(jnp.mean(h * h, axis=0, keepdims=True) - mu * mu, 0.0)
        scale = gamma * jax.lax.rsqrt(var + BN_EPS)   # rsqrt -> EUP slot
        shift = beta - mu * scale
        return jnp.maximum(h * scale + shift, 0.0)

    h = x_ref[...]
    h = bn_relu(linear(h, 0), 0)
    h = bn_relu(linear(h, 1), 1)
    h = bn_relu(linear(h, 2), 2)
    o_ref[...] = linear(h, 3)     # final linear, no BN/ReLU


# ---------------------------------------------------------------------------
# Wrapper
# ---------------------------------------------------------------------------
def pack_params(params):
    """Pack per-layer weights / bias / gamma / beta into two lane-dense slabs.

    Returns (w_slab [4,128,128] bf16, aff_slab [4,8,128] f32).  Padded rows/cols
    are zero, so padded lanes stay exactly zero through the whole network.
    """
    w_keys = ["w1", "w2", "w3", "w4"]
    b_keys = ["b1", "b2", "b3", "b4"]
    g_keys = ["g1", "g2", "g3", None]
    be_keys = ["be1", "be2", "be3", None]

    w_slab = []
    aff_slab = []
    for l in range(N_LAYERS):
        fi, fo = DIMS[l], DIMS[l + 1]
        w = jnp.zeros((PAD, PAD), jnp.bfloat16)
        w = w.at[:fi, :fo].set(params[w_keys[l]].astype(jnp.bfloat16))
        w_slab.append(w)

        aff = jnp.zeros((8, PAD), jnp.float32)
        aff = aff.at[0, :fo].set(params[b_keys[l]].reshape(-1))
        if g_keys[l] is not None:
            aff = aff.at[1, :fo].set(params[g_keys[l]].reshape(-1))
            aff = aff.at[2, :fo].set(params[be_keys[l]].reshape(-1))
        aff_slab.append(aff)

    return jnp.stack(w_slab), jnp.stack(aff_slab)


def network_forward(x, w_slab, aff_slab):
    """x: [B, INPUT_DIM] f32; packed slabs from pack_params. Returns [B, OUTPUT_DIM]."""
    B = x.shape[0]
    x_pad = jnp.zeros((B, PAD), jnp.float32).at[:, :INPUT_DIM].set(x)

    flops = 4 * 2 * B * PAD * PAD                      # 4 matmuls on padded tiles
    transcendentals = 3 * PAD                          # 3 rsqrt rows
    bytes_accessed = (
        B * PAD * 4                                    # x
        + N_LAYERS * PAD * PAD * 2                     # bf16 weight slab
        + N_LAYERS * 8 * PAD * 4                       # affine slab
        + B * PAD * 4                                  # output
    )

    vmem = pl.BlockSpec(memory_space=pltpu.MemorySpace.VMEM)
    out_pad = pl.pallas_call(
        mlp_kernel,
        out_shape=jax.ShapeDtypeStruct((B, PAD), jnp.float32),
        in_specs=[vmem, vmem, vmem],
        out_specs=vmem,
        cost_estimate=pl.CostEstimate(
            flops=flops,
            transcendentals=transcendentals,
            bytes_accessed=bytes_accessed,
        ),
    )(x_pad, w_slab, aff_slab)
    return out_pad[:, :OUTPUT_DIM]


# ---------------------------------------------------------------------------
# Parameter init + pure-JAX reference (same numerics: bf16 matmul operands,
# f32 accumulation, f32 BN with batch statistics)
# ---------------------------------------------------------------------------
def init_params(key):
    ks = jax.random.split(key, 8)

    def lin_init(kw, kb, fan_in, fan_out):
        bound = 1.0 / jnp.sqrt(fan_in)
        w = jax.random.uniform(kw, (fan_in, fan_out), jnp.float32, -bound, bound)
        b = jax.random.uniform(kb, (1, fan_out), jnp.float32, -bound, bound)
        return w, b

    w1, b1 = lin_init(ks[0], ks[1], INPUT_DIM, HIDDEN_1)
    w2, b2 = lin_init(ks[2], ks[3], HIDDEN_1, HIDDEN_2)
    w3, b3 = lin_init(ks[4], ks[5], HIDDEN_2, HIDDEN_3)
    w4, b4 = lin_init(ks[6], ks[7], HIDDEN_3, OUTPUT_DIM)

    return {
        "w1": w1, "b1": b1,
        "g1": jnp.ones((1, HIDDEN_1), jnp.float32), "be1": jnp.zeros((1, HIDDEN_1), jnp.float32),
        "w2": w2, "b2": b2,
        "g2": jnp.ones((1, HIDDEN_2), jnp.float32), "be2": jnp.zeros((1, HIDDEN_2), jnp.float32),
        "w3": w3, "b3": b3,
        "g3": jnp.ones((1, HIDDEN_3), jnp.float32), "be3": jnp.zeros((1, HIDDEN_3), jnp.float32),
        "w4": w4, "b4": b4,
    }


def reference_forward(x, p):
    def lin(h, w, b):
        return jnp.dot(h.astype(jnp.bfloat16), w.astype(jnp.bfloat16),
                       preferred_element_type=jnp.float32) + b

    def bn_relu(h, g, be):
        mu = h.mean(0, keepdims=True)
        var = ((h - mu) ** 2).mean(0, keepdims=True)
        return jnp.maximum(g * (h - mu) / jnp.sqrt(var + BN_EPS) + be, 0.0)

    h = bn_relu(lin(x, p["w1"], p["b1"]), p["g1"], p["be1"])
    h = bn_relu(lin(h, p["w2"], p["b2"]), p["g2"], p["be2"])
    h = bn_relu(lin(h, p["w3"], p["b3"]), p["g3"], p["be3"])
    return lin(h, p["w4"], p["b4"])


if __name__ == "__main__":
    key = jax.random.PRNGKey(0)
    kx, kp = jax.random.split(key)
    x = jax.random.normal(kx, (BATCH, INPUT_DIM), jnp.float32)
    params = init_params(kp)

    # Pack once (outside the kernel call path).
    w_slab, aff_slab = pack_params(params)

    out = network_forward(x, w_slab, aff_slab)
    out = jax.block_until_ready(out)

    ref = reference_forward(x, params)
    assert out.shape == (BATCH, OUTPUT_DIM)
    assert jnp.allclose(out, ref, atol=2e-3, rtol=2e-3), "mismatch vs reference"

    print("KERNEL_OK")
</pallas_src>

<mosaic_0001>
module attributes {stable_mosaic.version = 11 : i64} {
  func.func @mlp_kernel(%arg0: memref<8x128xf32, #tpu.memory_space<vmem>>, %arg1: memref<4x128x128xbf16, #tpu.memory_space<vmem>>, %arg2: memref<4x8x128xf32, #tpu.memory_space<vmem>>, %arg3: memref<8x128xf32, #tpu.memory_space<vmem>>) attributes {dimension_semantics = [], scalar_prefetch = 0 : i64, scratch_operands = 0 : i64, tpu.core_type = #tpu.core_type<tc>} {
    %c0 = arith.constant 0 : index
    %c0_0 = arith.constant 0 : index
    %0 = vector.load %arg0[%c0, %c0_0] : memref<8x128xf32, #tpu.memory_space<vmem>>, vector<8x128xf32>
    %1 = arith.truncf %0 : vector<8x128xf32> to vector<8x128xbf16>
    %c0_1 = arith.constant 0 : index
    %c0_2 = arith.constant 0 : index
    %c0_3 = arith.constant 0 : index
    %2 = vector.load %arg1[%c0_1, %c0_2, %c0_3] : memref<4x128x128xbf16, #tpu.memory_space<vmem>>, vector<1x128x128xbf16>
    %3 = vector.shape_cast %2 : vector<1x128x128xbf16> to vector<128x128xbf16>
    %cst = arith.constant dense<0.000000e+00> : vector<8x128xf32>
    %4 = tpu.matmul %1, %3, %cst {dimension_numbers = #tpu.dot_dimension_numbers<[1], [0], [0], [1], [0, 0, 1, 1], [], []>} : vector<8x128xbf16>, vector<128x128xbf16>, vector<8x128xf32> -> vector<8x128xf32>
    %c0_4 = arith.constant 0 : index
    %c0_5 = arith.constant 0 : index
    %c0_6 = arith.constant 0 : index
    %5 = vector.load %arg2[%c0_4, %c0_5, %c0_6] : memref<4x8x128xf32, #tpu.memory_space<vmem>>, vector<1x1x128xf32>
    %6 = vector.shape_cast %5 : vector<1x1x128xf32> to vector<1x128xf32>
    %7 = vector.broadcast %6 : vector<1x128xf32> to vector<8x128xf32>
    %8 = arith.addf %4, %7 : vector<8x128xf32>
    %c0_7 = arith.constant 0 : index
    %c1 = arith.constant 1 : index
    %c0_8 = arith.constant 0 : index
    %9 = vector.load %arg2[%c0_7, %c1, %c0_8] : memref<4x8x128xf32, #tpu.memory_space<vmem>>, vector<1x1x128xf32>
    %10 = vector.shape_cast %9 : vector<1x1x128xf32> to vector<1x128xf32>
    %c0_9 = arith.constant 0 : index
    %c2 = arith.constant 2 : index
    %c0_10 = arith.constant 0 : index
    %11 = vector.load %arg2[%c0_9, %c2, %c0_10] : memref<4x8x128xf32, #tpu.memory_space<vmem>>, vector<1x1x128xf32>
    %12 = vector.shape_cast %11 : vector<1x1x128xf32> to vector<1x128xf32>
    %cst_11 = arith.constant dense<0.000000e+00> : vector<128xf32>
    %13 = vector.multi_reduction <add>, %8, %cst_11 [0] : vector<8x128xf32> to vector<128xf32>
    %14 = vector.shape_cast %13 : vector<128xf32> to vector<1x128xf32>
    %cst_12 = arith.constant 8.000000e+00 : f32
    %15 = vector.broadcast %cst_12 : f32 to vector<1x128xf32>
    %16 = arith.divf %14, %15 : vector<1x128xf32>
    %17 = arith.mulf %8, %8 : vector<8x128xf32>
    %cst_13 = arith.constant dense<0.000000e+00> : vector<128xf32>
    %18 = vector.multi_reduction <add>, %17, %cst_13 [0] : vector<8x128xf32> to vector<128xf32>
    %19 = vector.shape_cast %18 : vector<128xf32> to vector<1x128xf32>
    %cst_14 = arith.constant 8.000000e+00 : f32
    %20 = vector.broadcast %cst_14 : f32 to vector<1x128xf32>
    %21 = arith.divf %19, %20 : vector<1x128xf32>
    %22 = arith.mulf %16, %16 : vector<1x128xf32>
    %23 = arith.subf %21, %22 : vector<1x128xf32>
    %cst_15 = arith.constant 0.000000e+00 : f32
    %24 = vector.broadcast %cst_15 : f32 to vector<1x128xf32>
    %25 = arith.maximumf %23, %24 : vector<1x128xf32>
    %cst_16 = arith.constant 9.99999974E-6 : f32
    %26 = vector.broadcast %cst_16 : f32 to vector<1x128xf32>
    %27 = arith.addf %25, %26 : vector<1x128xf32>
    %28 = math.rsqrt %27 : vector<1x128xf32>
    %29 = arith.mulf %10, %28 : vector<1x128xf32>
    %30 = arith.mulf %16, %29 : vector<1x128xf32>
    %31 = arith.subf %12, %30 : vector<1x128xf32>
    %32 = vector.broadcast %29 : vector<1x128xf32> to vector<8x128xf32>
    %33 = arith.mulf %8, %32 : vector<8x128xf32>
    %34 = vector.broadcast %31 : vector<1x128xf32> to vector<8x128xf32>
    %35 = arith.addf %33, %34 : vector<8x128xf32>
    %cst_17 = arith.constant 0.000000e+00 : f32
    %36 = vector.broadcast %cst_17 : f32 to vector<8x128xf32>
    %37 = arith.maximumf %35, %36 : vector<8x128xf32>
    %38 = arith.truncf %37 : vector<8x128xf32> to vector<8x128xbf16>
    %c1_18 = arith.constant 1 : index
    %c0_19 = arith.constant 0 : index
    %c0_20 = arith.constant 0 : index
    %39 = vector.load %arg1[%c1_18, %c0_19, %c0_20] : memref<4x128x128xbf16, #tpu.memory_space<vmem>>, vector<1x128x128xbf16>
    %40 = vector.shape_cast %39 : vector<1x128x128xbf16> to vector<128x128xbf16>
    %cst_21 = arith.constant dense<0.000000e+00> : vector<8x128xf32>
    %41 = tpu.matmul %38, %40, %cst_21 {dimension_numbers = #tpu.dot_dimension_numbers<[1], [0], [0], [1], [0, 0, 1, 1], [], []>} : vector<8x128xbf16>, vector<128x128xbf16>, vector<8x128xf32> -> vector<8x128xf32>
    %c1_22 = arith.constant 1 : index
    %c0_23 = arith.constant 0 : index
    %c0_24 = arith.constant 0 : index
    %42 = vector.load %arg2[%c1_22, %c0_23, %c0_24] : memref<4x8x128xf32, #tpu.memory_space<vmem>>, vector<1x1x128xf32>
    %43 = vector.shape_cast %42 : vector<1x1x128xf32> to vector<1x128xf32>
    %44 = vector.broadcast %43 : vector<1x128xf32> to vector<8x128xf32>
    %45 = arith.addf %41, %44 : vector<8x128xf32>
    %c1_25 = arith.constant 1 : index
    %c1_26 = arith.constant 1 : index
    %c0_27 = arith.constant 0 : index
    %46 = vector.load %arg2[%c1_25, %c1_26, %c0_27] : memref<4x8x128xf32, #tpu.memory_space<vmem>>, vector<1x1x128xf32>
    %47 = vector.shape_cast %46 : vector<1x1x128xf32> to vector<1x128xf32>
    %c1_28 = arith.constant 1 : index
    %c2_29 = arith.constant 2 : index
    %c0_30 = arith.constant 0 : index
    %48 = vector.load %arg2[%c1_28, %c2_29, %c0_30] : memref<4x8x128xf32, #tpu.memory_space<vmem>>, vector<1x1x128xf32>
    %49 = vector.shape_cast %48 : vector<1x1x128xf32> to vector<1x128xf32>
    %cst_31 = arith.constant dense<0.000000e+00> : vector<128xf32>
    %50 = vector.multi_reduction <add>, %45, %cst_31 [0] : vector<8x128xf32> to vector<128xf32>
    %51 = vector.shape_cast %50 : vector<128xf32> to vector<1x128xf32>
    %cst_32 = arith.constant 8.000000e+00 : f32
    %52 = vector.broadcast %cst_32 : f32 to vector<1x128xf32>
    %53 = arith.divf %51, %52 : vector<1x128xf32>
    %54 = arith.mulf %45, %45 : vector<8x128xf32>
    %cst_33 = arith.constant dense<0.000000e+00> : vector<128xf32>
    %55 = vector.multi_reduction <add>, %54, %cst_33 [0] : vector<8x128xf32> to vector<128xf32>
    %56 = vector.shape_cast %55 : vector<128xf32> to vector<1x128xf32>
    %cst_34 = arith.constant 8.000000e+00 : f32
    %57 = vector.broadcast %cst_34 : f32 to vector<1x128xf32>
    %58 = arith.divf %56, %57 : vector<1x128xf32>
    %59 = arith.mulf %53, %53 : vector<1x128xf32>
    %60 = arith.subf %58, %59 : vector<1x128xf32>
    %cst_35 = arith.constant 0.000000e+00 : f32
    %61 = vector.broadcast %cst_35 : f32 to vector<1x128xf32>
    %62 = arith.maximumf %60, %61 : vector<1x128xf32>
    %cst_36 = arith.constant 9.99999974E-6 : f32
    %63 = vector.broadcast %cst_36 : f32 to vector<1x128xf32>
    %64 = arith.addf %62, %63 : vector<1x128xf32>
    %65 = math.rsqrt %64 : vector<1x128xf32>
    %66 = arith.mulf %47, %65 : vector<1x128xf32>
    %67 = arith.mulf %53, %66 : vector<1x128xf32>
    %68 = arith.subf %49, %67 : vector<1x128xf32>
    %69 = vector.broadcast %66 : vector<1x128xf32> to vector<8x128xf32>
    %70 = arith.mulf %45, %69 : vector<8x128xf32>
    %71 = vector.broadcast %68 : vector<1x128xf32> to vector<8x128xf32>
    %72 = arith.addf %70, %71 : vector<8x128xf32>
    %cst_37 = arith.constant 0.000000e+00 : f32
    %73 = vector.broadcast %cst_37 : f32 to vector<8x128xf32>
    %74 = arith.maximumf %72, %73 : vector<8x128xf32>
    %75 = arith.truncf %74 : vector<8x128xf32> to vector<8x128xbf16>
    %c2_38 = arith.constant 2 : index
    %c0_39 = arith.constant 0 : index
    %c0_40 = arith.constant 0 : index
    %76 = vector.load %arg1[%c2_38, %c0_39, %c0_40] : memref<4x128x128xbf16, #tpu.memory_space<vmem>>, vector<1x128x128xbf16>
    %77 = vector.shape_cast %76 : vector<1x128x128xbf16> to vector<128x128xbf16>
    %cst_41 = arith.constant dense<0.000000e+00> : vector<8x128xf32>
    %78 = tpu.matmul %75, %77, %cst_41 {dimension_numbers = #tpu.dot_dimension_numbers<[1], [0], [0], [1], [0, 0, 1, 1], [], []>} : vector<8x128xbf16>, vector<128x128xbf16>, vector<8x128xf32> -> vector<8x128xf32>
    %c2_42 = arith.constant 2 : index
    %c0_43 = arith.constant 0 : index
    %c0_44 = arith.constant 0 : index
    %79 = vector.load %arg2[%c2_42, %c0_43, %c0_44] : memref<4x8x128xf32, #tpu.memory_space<vmem>>, vector<1x1x128xf32>
    %80 = vector.shape_cast %79 : vector<1x1x128xf32> to vector<1x128xf32>
    %81 = vector.broadcast %80 : vector<1x128xf32> to vector<8x128xf32>
    %82 = arith.addf %78, %81 : vector<8x128xf32>
    %c2_45 = arith.constant 2 : index
    %c1_46 = arith.constant 1 : index
    %c0_47 = arith.constant 0 : index
    %83 = vector.load %arg2[%c2_45, %c1_46, %c0_47] : memref<4x8x128xf32, #tpu.memory_space<vmem>>, vector<1x1x128xf32>
    %84 = vector.shape_cast %83 : vector<1x1x128xf32> to vector<1x128xf32>
    %c2_48 = arith.constant 2 : index
    %c2_49 = arith.constant 2 : index
    %c0_50 = arith.constant 0 : index
    %85 = vector.load %arg2[%c2_48, %c2_49, %c0_50] : memref<4x8x128xf32, #tpu.memory_space<vmem>>, vector<1x1x128xf32>
    %86 = vector.shape_cast %85 : vector<1x1x128xf32> to vector<1x128xf32>
    %cst_51 = arith.constant dense<0.000000e+00> : vector<128xf32>
    %87 = vector.multi_reduction <add>, %82, %cst_51 [0] : vector<8x128xf32> to vector<128xf32>
    %88 = vector.shape_cast %87 : vector<128xf32> to vector<1x128xf32>
    %cst_52 = arith.constant 8.000000e+00 : f32
    %89 = vector.broadcast %cst_52 : f32 to vector<1x128xf32>
    %90 = arith.divf %88, %89 : vector<1x128xf32>
    %91 = arith.mulf %82, %82 : vector<8x128xf32>
    %cst_53 = arith.constant dense<0.000000e+00> : vector<128xf32>
    %92 = vector.multi_reduction <add>, %91, %cst_53 [0] : vector<8x128xf32> to vector<128xf32>
    %93 = vector.shape_cast %92 : vector<128xf32> to vector<1x128xf32>
    %cst_54 = arith.constant 8.000000e+00 : f32
    %94 = vector.broadcast %cst_54 : f32 to vector<1x128xf32>
    %95 = arith.divf %93, %94 : vector<1x128xf32>
    %96 = arith.mulf %90, %90 : vector<1x128xf32>
    %97 = arith.subf %95, %96 : vector<1x128xf32>
    %cst_55 = arith.constant 0.000000e+00 : f32
    %98 = vector.broadcast %cst_55 : f32 to vector<1x128xf32>
    %99 = arith.maximumf %97, %98 : vector<1x128xf32>
    %cst_56 = arith.constant 9.99999974E-6 : f32
    %100 = vector.broadcast %cst_56 : f32 to vector<1x128xf32>
    %101 = arith.addf %99, %100 : vector<1x128xf32>
    %102 = math.rsqrt %101 : vector<1x128xf32>
    %103 = arith.mulf %84, %102 : vector<1x128xf32>
    %104 = arith.mulf %90, %103 : vector<1x128xf32>
    %105 = arith.subf %86, %104 : vector<1x128xf32>
    %106 = vector.broadcast %103 : vector<1x128xf32> to vector<8x128xf32>
    %107 = arith.mulf %82, %106 : vector<8x128xf32>
    %108 = vector.broadcast %105 : vector<1x128xf32> to vector<8x128xf32>
    %109 = arith.addf %107, %108 : vector<8x128xf32>
    %cst_57 = arith.constant 0.000000e+00 : f32
    %110 = vector.broadcast %cst_57 : f32 to vector<8x128xf32>
    %111 = arith.maximumf %109, %110 : vector<8x128xf32>
    %112 = arith.truncf %111 : vector<8x128xf32> to vector<8x128xbf16>
    %c3 = arith.constant 3 : index
    %c0_58 = arith.constant 0 : index
    %c0_59 = arith.constant 0 : index
    %113 = vector.load %arg1[%c3, %c0_58, %c0_59] : memref<4x128x128xbf16, #tpu.memory_space<vmem>>, vector<1x128x128xbf16>
    %114 = vector.shape_cast %113 : vector<1x128x128xbf16> to vector<128x128xbf16>
    %cst_60 = arith.constant dense<0.000000e+00> : vector<8x128xf32>
    %115 = tpu.matmul %112, %114, %cst_60 {dimension_numbers = #tpu.dot_dimension_numbers<[1], [0], [0], [1], [0, 0, 1, 1], [], []>} : vector<8x128xbf16>, vector<128x128xbf16>, vector<8x128xf32> -> vector<8x128xf32>
    %c3_61 = arith.constant 3 : index
    %c0_62 = arith.constant 0 : index
    %c0_63 = arith.constant 0 : index
    %116 = vector.load %arg2[%c3_61, %c0_62, %c0_63] : memref<4x8x128xf32, #tpu.memory_space<vmem>>, vector<1x1x128xf32>
    %117 = vector.shape_cast %116 : vector<1x1x128xf32> to vector<1x128xf32>
    %118 = vector.broadcast %117 : vector<1x128xf32> to vector<8x128xf32>
    %119 = arith.addf %115, %118 : vector<8x128xf32>
    %c0_64 = arith.constant 0 : index
    %c0_65 = arith.constant 0 : index
    %120 = vector.load %arg3[%c0_64, %c0_65] : memref<8x128xf32, #tpu.memory_space<vmem>>, vector<8x128xf32>
    tpu.vector_store %arg3[%c0_64, %c0_65], %119 {strides = array<i32>} : memref<8x128xf32, #tpu.memory_space<vmem>>, vector<8x128xf32>,
    return
  }
}

</mosaic_0001>

<llo_original>
// kernel: tpu_custom_call.1
$region0: #{tpu_custom_call.1}
  #allocation0 [shape = 'u32[]', space=smem, size = 0x4, offset = 0x4, fixed_abs, tag = 'smem constant byte address 0x4 - core index']
  #allocation1 [shape = 'u32[144,128]{1,0:T(1,128)}', space=vmem, size = 0x12000, scoped, tag = 'internal scratch']
  %s0 = inlined_call_operand.hbm [shape: f32[8,128], index: 0, kind: input, shape index: {}]
  %s1 = inlined_call_operand.hbm [shape: bf16[4,128,128], index: 1, kind: input, shape index: {}]
  %s2 = inlined_call_operand.hbm [shape: f32[4,8,128], index: 2, kind: input, shape index: {}]
  %s3 = inlined_call_operand.hbm [shape: f32[8,128], index: 3, kind: output, shape index: {}]
  %s4 = sld [smem:[#allocation0]]
  $region34: #{tpu_custom_call.1} parent=0
    _
  %s6 = ssub.s32 1, %s4
  %s7 = scalar_select 0, %s6, %s4
  $region1: #{tpu_custom_call.1} parent=0
    #allocation2 [shape = 'u8[4096]{0}', space=vmem, size = 0x1000, scoped, tag = 'input window, operand 0, single buffered']
    #allocation3 [shape = 's32[1]{0}', space=sflag, size = 0x4, scoped, tag = 'scoped memory for tpu_custom_call.1']
    #allocation4 [shape = 's32[1]{0}', space=sflag, size = 0x4, scoped, tag = 'scoped memory for tpu_custom_call.1']
    #allocation5 [shape = 'u8[131072]{0}', space=vmem, size = 0x20000, scoped, tag = 'input window, operand 1, single buffered']
    #allocation6 [shape = 's32[1]{0}', space=sflag, size = 0x4, scoped, tag = 'scoped memory for tpu_custom_call.1']
    #allocation7 [shape = 'u8[16384]{0}', space=vmem, size = 0x4000, scoped, tag = 'input window, operand 2, single buffered']
    #allocation8 [shape = 'u8[4096]{0}', space=vmem, size = 0x1000, scoped, tag = 'output window, operand 0, single buffered']
    %8 = vsyncpa [#allocation3], 0
    %9 = vsyncpa [#allocation6], 0
    %10 = vsyncpa [#allocation4], 0
    // Predicated region
    $region2: #{tpu_custom_call.1} parent=1 // pred_check
      _
    $region3: #{tpu_custom_call.1} parent=1 // pred_check_branch
      %12 = sbr.rel (0) target = $region5
    $region4: #{tpu_custom_call.1} parent=1 // pred_region
      %s14 = ssub.s32 128, 128
      %15 = vsyncadd [#allocation3], %s14
      %s17 = sshll.u32 [#allocation2], 4
      %s18 = int_to_ptr.vmem [resolvable:$true] %s17
      %20 = dma.hbm_to_vmem [thread:$0]  %s0, 128, %s18, [#allocation3]
    $region5: #{tpu_custom_call.1} parent=1 // pred_fallthru
      _
    // Predicated region
    $region6: #{tpu_custom_call.1} parent=1 // pred_check
      _
    $region7: #{tpu_custom_call.1} parent=1 // pred_check_branch
      %22 = sbr.rel (0) target = $region9
    $region8: #{tpu_custom_call.1} parent=1 // pred_region
      %s24 = ssub.s32 4096, 4096
      %25 = vsyncadd [#allocation6], %s24
      %s26 = sshll.u32 [#allocation5], 4
      %s27 = int_to_ptr.vmem [resolvable:$true] %s26
      %32 = dma.hbm_to_vmem [thread:$0]  %s1, 4096, %s27, [#allocation6], 64, 64, 4
    $region9: #{tpu_custom_call.1} parent=1 // pred_fallthru
      _
    // Predicated region
    $region10: #{tpu_custom_call.1} parent=1 // pred_check
      _
    $region11: #{tpu_custom_call.1} parent=1 // pred_check_branch
      %34 = sbr.rel (0) target = $region13
    $region12: #{tpu_custom_call.1} parent=1 // pred_region
      %s36 = ssub.s32 512, 512
      %37 = vsyncadd [#allocation6], %s36
      %s38 = sshll.u32 [#allocation7], 4
      %s39 = int_to_ptr.vmem [resolvable:$true] %s38
      %44 = dma.hbm_to_vmem [thread:$0]  %s2, 512, %s39, [#allocation6], 128, 128, 8
    $region13: #{tpu_custom_call.1} parent=1 // pred_fallthru
      _
    // Predicated region
    $region14: #{tpu_custom_call.1} parent=1 // pred_check
      _
    $region15: #{tpu_custom_call.1} parent=1 // pred_check_branch
      %46 = sbr.rel (0) target = $region17
    $region16: #{tpu_custom_call.1} parent=1 // pred_region
      %47 = dma.done [#allocation3], 128
    $region17: #{tpu_custom_call.1} parent=1 // pred_fallthru
      _
    // Predicated region
    $region18: #{tpu_custom_call.1} parent=1 // pred_check
      _
    $region19: #{tpu_custom_call.1} parent=1 // pred_check_branch
      %49 = sbr.rel (0) target = $region21
    $region20: #{tpu_custom_call.1} parent=1 // pred_region
      %50 = dma.done [#allocation6], 4096
    $region21: #{tpu_custom_call.1} parent=1 // pred_fallthru
      _
    // Predicated region
    $region22: #{tpu_custom_call.1} parent=1 // pred_check
      _
    $region23: #{tpu_custom_call.1} parent=1 // pred_check_branch
      %52 = sbr.rel (0) target = $region25
    $region24: #{tpu_custom_call.1} parent=1 // pred_region
      %53 = dma.done [#allocation6], 512
    $region25: #{tpu_custom_call.1} parent=1 // pred_fallthru
      _
    %v55 = vld [vmem:[#allocation2] sm:$0xff]
    %v56 = vpack.c.bf16 %v55, %v55
    %v57 = vld [vmem:[#allocation5] sm:$0xf]
    %v58 = vld [vmem:[#allocation5 + $0x4] sm:$0xf]
    %v59 = vld [vmem:[#allocation5 + $0x8] sm:$0xf]
    %v60 = vld [vmem:[#allocation5 + $0xc] sm:$0xf]
    %v61 = vld [vmem:[#allocation5 + $0x10] sm:$0xf]
    %v62 = vld [vmem:[#allocation5 + $0x14] sm:$0xf]
    %v63 = vld [vmem:[#allocation5 + $0x18] sm:$0xf]
    %v64 = vld [vmem:[#allocation5 + $0x1c] sm:$0xf]
    %v65 = vld [vmem:[#allocation5 + $0x20] sm:$0xf]
    %v66 = vld [vmem:[#allocation5 + $0x24] sm:$0xf]
    %v67 = vld [vmem:[#allocation5 + $0x28] sm:$0xf]
    %v68 = vld [vmem:[#allocation5 + $0x2c] sm:$0xf]
    %v69 = vld [vmem:[#allocation5 + $0x30] sm:$0xf]
    %v70 = vld [vmem:[#allocation5 + $0x34] sm:$0xf]
    %v71 = vld [vmem:[#allocation5 + $0x38] sm:$0xf]
    %v72 = vld [vmem:[#allocation5 + $0x3c] sm:$0xf]
    %v73 = vld [vmem:[#allocation7] sm:$0x1]
    %v74 = vlaneseq
    %v75 = vshrl.u32 %v74, 7
    %v76 = vsub.s32 0, %v75
    %v77 = vrot.slane %v73, %v76
    %v94 = vunpack.c.l.b16 %v57
    %v95 = vunpack.c.l.b16 %v58
    %v96 = vunpack.c.l.b16 %v59
    %v97 = vunpack.c.l.b16 %v60
    %v98 = vunpack.c.l.b16 %v61
    %v99 = vunpack.c.l.b16 %v62
    %v100 = vunpack.c.l.b16 %v63
    %v101 = vunpack.c.l.b16 %v64
    %v102 = vunpack.c.l.b16 %v65
    %v103 = vunpack.c.l.b16 %v66
    %v104 = vunpack.c.l.b16 %v67
    %v105 = vunpack.c.l.b16 %v68
    %v106 = vunpack.c.l.b16 %v69
    %v107 = vunpack.c.l.b16 %v70
    %v108 = vunpack.c.l.b16 %v71
    %v109 = vunpack.c.l.b16 %v72
    %v110 = vpack.c.b16 %v95, %v94
    %v111 = vpack.c.b16 %v97, %v96
    %v112 = vpack.c.b16 %v99, %v98
    %v113 = vpack.c.b16 %v101, %v100
    %v114 = vpack.c.b16 %v103, %v102
    %v115 = vpack.c.b16 %v105, %v104
    %v116 = vpack.c.b16 %v107, %v106
    %v117 = vpack.c.b16 %v109, %v108
    %126 = vmatprep.subr.bf16.mxu0 0
    %127 = vmatpush1.bf16.msra.mxu0 %v117
    %128 = vmatprep.subr.bf16.mxu0 0
    %129 = vmatpush1.bf16.msra.mxu0 %v116
    %130 = vmatprep.subr.bf16.mxu0 0
    %131 = vmatpush1.bf16.msra.mxu0 %v115
    %132 = vmatprep.subr.bf16.mxu0 0
    %133 = vmatpush1.bf16.msra.mxu0 %v114
    %134 = vmatprep.subr.bf16.mxu0 0
    %135 = vmatpush1.bf16.msra.mxu0 %v113
    %136 = vmatprep.subr.bf16.mxu0 0
    %137 = vmatpush1.bf16.msra.mxu0 %v112
    %138 = vmatprep.subr.bf16.mxu0 0
    %139 = vmatpush1.bf16.msra.mxu0 %v111
    %140 = vmatprep.subr.bf16.mxu0 0
    %141 = vmatpush1.bf16.msra.mxu0 %v110
    %142 = vmatprep.subr.bf16.mxu0 0
    %143 = vmatpush2.bf16.msra.mxu0 0
    %144 = vmatprep.subr.bf16.mxu0 0
    %145 = vmatpush2.bf16.msra.mxu0 0
    %146 = vmatprep.subr.bf16.mxu0 0
    %147 = vmatpush2.bf16.msra.mxu0 0
    %148 = vmatprep.subr.bf16.mxu0 0
    %149 = vmatpush2.bf16.msra.mxu0 0
    %150 = vmatprep.subr.bf16.mxu0 0
    %151 = vmatpush2.bf16.msra.mxu0 0
    %152 = vmatprep.subr.bf16.mxu0 0
    %153 = vmatpush2.bf16.msra.mxu0 0
    %154 = vmatprep.subr.bf16.mxu0 0
    %155 = vmatpush2.bf16.msra.mxu0 0
    %156 = vmatprep.subr.bf16.mxu0 0
    %157 = vmatpush2.bf16.msra.mxu0 0
    %158 = vmatprep.mubr.bf16.mxu0 0
    %159 = vmatmul.mubr.bf16.gmra.mxu0 %v56
    %v160 = vpop.f32.mrf.mxu0
    %v161 = vadd.f32 %v77, %v160
    %v162 = vpop.f32.mrf.mxu0
    %v163 = vpop.f32.mrf.mxu0
    %v164 = vpop.f32.mrf.mxu0
    %165 = vdwg.mxu0
    %v166 = vld [vmem:[#allocation7 + $0x1] sm:$0x1]
    %v167 = vld [vmem:[#allocation7 + $0x2] sm:$0x1]
    %v168 = vrot.slane %v161, 4
    %v169 = vadd.f32 %v161, %v168
    %v170 = vrot.slane %v169, 2
    %v171 = vadd.f32 %v169, %v170
    %v172 = vrot.slane %v171, 1
    %v173 = vadd.f32 %v171, %v172
    %v174 = vrcp.pop 8.0
    %v175 = vmul.f32 %v173, %v174
    %v176 = vmul.f32 %v161, %v161
    %v177 = vrot.slane %v176, 4
    %v178 = vadd.f32 %v176, %v177
    %v179 = vrot.slane %v178, 2
    %v180 = vadd.f32 %v178, %v179
    %v181 = vrot.slane %v180, 1
    %v182 = vadd.f32 %v180, %v181
    %v183 = vmul.f32 %v182, %v174
    %v184 = vmul.f32 %v175, %v175
    %v185 = vsub.f32 %v183, %v184
    %v186 = vmax.f32 %v185, 0.0
    %v187 = vadd.f32 %v186, 1e-05
    %v188 = vrsqrt.pop %v187
    %v189 = vmul.f32 %v166, %v188
    %v190 = vmul.f32 %v175, %v189
    %v191 = vsub.f32 %v167, %v190
    %v192 = vlaneseq
    %v193 = vshrl.u32 %v192, 7
    %v194 = vsub.s32 0, %v193
    %v195 = vrot.slane %v189, %v194
    %v196 = vmul.f32 %v161, %v195
    %v197 = vlaneseq
    %v198 = vshrl.u32 %v197, 7
    %v199 = vsub.s32 0, %v198
    %v200 = vrot.slane %v191, %v199
    %v201 = vadd.f32 %v196, %v200
    %v202 = vmax.f32 %v201, 0.0
    %v203 = vpack.c.bf16 %v202, %v202
    %s204 = scalar_lea.vmem [#allocation5], 64
    %v205 = vld [vmem:[%s204] sm:$0xf]
    %v206 = vld [vmem:[%s204 + $0x4] sm:$0xf]
    %v207 = vld [vmem:[%s204 + $0x8] sm:$0xf]
    %v208 = vld [vmem:[%s204 + $0xc] sm:$0xf]
    %v209 = vld [vmem:[%s204 + $0x10] sm:$0xf]
    %v210 = vld [vmem:[%s204 + $0x14] sm:$0xf]
    %v211 = vld [vmem:[%s204 + $0x18] sm:$0xf]
    %v212 = vld [vmem:[%s204 + $0x1c] sm:$0xf]
    %v213 = vld [vmem:[%s204 + $0x20] sm:$0xf]
    %v214 = vld [vmem:[%s204 + $0x24] sm:$0xf]
    %v215 = vld [vmem:[%s204 + $0x28] sm:$0xf]
    %v216 = vld [vmem:[%s204 + $0x2c] sm:$0xf]
    %v217 = vld [vmem:[%s204 + $0x30] sm:$0xf]
    %v218 = vld [vmem:[%s204 + $0x34] sm:$0xf]
    %v219 = vld [vmem:[%s204 + $0x38] sm:$0xf]
    %v220 = vld [vmem:[%s204 + $0x3c] sm:$0xf]
    %s221 = scalar_lea.vmem [#allocation7], 8
    %v222 = vld [vmem:[%s221] sm:$0x1]
    %v223 = vlaneseq
    %v224 = vshrl.u32 %v223, 7
    %v225 = vsub.s32 0, %v224
    %v226 = vrot.slane %v222, %v225
    %v243 = vunpack.c.l.b16 %v205
    %v244 = vunpack.c.l.b16 %v206
    %v245 = vunpack.c.l.b16 %v207
    %v246 = vunpack.c.l.b16 %v208
    %v247 = vunpack.c.l.b16 %v209
    %v248 = vunpack.c.l.b16 %v210
    %v249 = vunpack.c.l.b16 %v211
    %v250 = vunpack.c.l.b16 %v212
    %v251 = vunpack.c.l.b16 %v213
    %v252 = vunpack.c.l.b16 %v214
    %v253 = vunpack.c.l.b16 %v215
    %v254 = vunpack.c.l.b16 %v216
    %v255 = vunpack.c.l.b16 %v217
    %v256 = vunpack.c.l.b16 %v218
    %v257 = vunpack.c.l.b16 %v219
    %v258 = vunpack.c.l.b16 %v220
    %v259 = vpack.c.b16 %v244, %v243
    %v260 = vpack.c.b16 %v246, %v245
    %v261 = vpack.c.b16 %v248, %v247
    %v262 = vpack.c.b16 %v250, %v249
    %v263 = vpack.c.b16 %v252, %v251
    %v264 = vpack.c.b16 %v254, %v253
    %v265 = vpack.c.b16 %v256, %v255
    %v266 = vpack.c.b16 %v258, %v257
    %275 = vmatprep.subr.bf16.mxu0 0
    %276 = vmatpush1.bf16.msra.mxu0 %v266
    %277 = vmatprep.subr.bf16.mxu0 0
    %278 = vmatpush1.bf16.msra.mxu0 %v265
    %279 = vmatprep.subr.bf16.mxu0 0
    %280 = vmatpush1.bf16.msra.mxu0 %v264
    %281 = vmatprep.subr.bf16.mxu0 0
    %282 = vmatpush1.bf16.msra.mxu0 %v263
    %283 = vmatprep.subr.bf16.mxu0 0
    %284 = vmatpush1.bf16.msra.mxu0 %v262
    %285 = vmatprep.subr.bf16.mxu0 0
    %286 = vmatpush1.bf16.msra.mxu0 %v261
    %287 = vmatprep.subr.bf16.mxu0 0
    %288 = vmatpush1.bf16.msra.mxu0 %v260
    %289 = vmatprep.subr.bf16.mxu0 0
    %290 = vmatpush1.bf16.msra.mxu0 %v259
    %291 = vmatprep.subr.bf16.mxu0 0
    %292 = vmatpush2.bf16.msra.mxu0 0
    %293 = vmatprep.subr.bf16.mxu0 0
    %294 = vmatpush2.bf16.msra.mxu0 0
    %295 = vmatprep.subr.bf16.mxu0 0
    %296 = vmatpush2.bf16.msra.mxu0 0
    %297 = vmatprep.subr.bf16.mxu0 0
    %298 = vmatpush2.bf16.msra.mxu0 0
    %299 = vmatprep.subr.bf16.mxu0 0
    %300 = vmatpush2.bf16.msra.mxu0 0
    %301 = vmatprep.subr.bf16.mxu0 0
    %302 = vmatpush2.bf16.msra.mxu0 0
    %303 = vmatprep.subr.bf16.mxu0 0
    %304 = vmatpush2.bf16.msra.mxu0 0
    %305 = vmatprep.subr.bf16.mxu0 0
    %306 = vmatpush2.bf16.msra.mxu0 0
    %307 = vmatprep.mubr.bf16.mxu0 0
    %308 = vmatmul.mubr.bf16.gmra.mxu0 %v203
    %v309 = vpop.f32.mrf.mxu0
    %v310 = vadd.f32 %v226, %v309
    %v311 = vpop.f32.mrf.mxu0
    %v312 = vpop.f32.mrf.mxu0
    %v313 = vpop.f32.mrf.mxu0
    %314 = vdwg.mxu0
    %v315 = vld [vmem:[%s221 + $0x1] sm:$0x1]
    %v316 = vld [vmem:[%s221 + $0x2] sm:$0x1]
    %v317 = vrot.slane %v310, 4
    %v318 = vadd.f32 %v310, %v317
    %v319 = vrot.slane %v318, 2
    %v320 = vadd.f32 %v318, %v319
    %v321 = vrot.slane %v320, 1
    %v322 = vadd.f32 %v320, %v321
    %v323 = vmul.f32 %v322, %v174
    %v324 = vmul.f32 %v310, %v310
    %v325 = vrot.slane %v324, 4
    %v326 = vadd.f32 %v324, %v325
    %v327 = vrot.slane %v326, 2
    %v328 = vadd.f32 %v326, %v327
    %v329 = vrot.slane %v328, 1
    %v330 = vadd.f32 %v328, %v329
    %v331 = vmul.f32 %v330, %v174
    %v332 = vmul.f32 %v323, %v323
    %v333 = vsub.f32 %v331, %v332
    %v334 = vmax.f32 %v333, 0.0
    %v335 = vadd.f32 %v334, 1e-05
    %v336 = vrsqrt.pop %v335
    %v337 = vmul.f32 %v315, %v336
    %v338 = vmul.f32 %v323, %v337
    %v339 = vsub.f32 %v316, %v338
    %v340 = vlaneseq
    %v341 = vshrl.u32 %v340, 7
    %v342 = vsub.s32 0, %v341
    %v343 = vrot.slane %v337, %v342
    %v344 = vmul.f32 %v310, %v343
    %v345 = vlaneseq
    %v346 = vshrl.u32 %v345, 7
    %v347 = vsub.s32 0, %v346
    %v348 = vrot.slane %v339, %v347
    %v349 = vadd.f32 %v344, %v348
    %v350 = vmax.f32 %v349, 0.0
    %v351 = vpack.c.bf16 %v350, %v350
    %s352 = scalar_lea.vmem [#allocation5], 128
    %v353 = vld [vmem:[%s352] sm:$0xf]
    %v354 = vld [vmem:[%s352 + $0x4] sm:$0xf]
    %v355 = vld [vmem:[%s352 + $0x8] sm:$0xf]
    %v356 = vld [vmem:[%s352 + $0xc] sm:$0xf]
    %v357 = vld [vmem:[%s352 + $0x10] sm:$0xf]
    %v358 = vld [vmem:[%s352 + $0x14] sm:$0xf]
    %v359 = vld [vmem:[%s352 + $0x18] sm:$0xf]
    %v360 = vld [vmem:[%s352 + $0x1c] sm:$0xf]
    %v361 = vld [vmem:[%s352 + $0x20] sm:$0xf]
    %v362 = vld [vmem:[%s352 + $0x24] sm:$0xf]
    %v363 = vld [vmem:[%s352 + $0x28] sm:$0xf]
    %v364 = vld [vmem:[%s352 + $0x2c] sm:$0xf]
    %v365 = vld [vmem:[%s352 + $0x30] sm:$0xf]
    %v366 = vld [vmem:[%s352 + $0x34] sm:$0xf]
    %v367 = vld [vmem:[%s352 + $0x38] sm:$0xf]
    %v368 = vld [vmem:[%s352 + $0x3c] sm:$0xf]
    %s369 = scalar_lea.vmem [#allocation7], 16
    %v370 = vld [vmem:[%s369] sm:$0x1]
    %v371 = vlaneseq
    %v372 = vshrl.u32 %v371, 7
    %v373 = vsub.s32 0, %v372
    %v374 = vrot.slane %v370, %v373
    %v391 = vunpack.c.l.b16 %v353
    %v392 = vunpack.c.l.b16 %v354
    %v393 = vunpack.c.l.b16 %v355
    %v394 = vunpack.c.l.b16 %v356
    %v395 = vunpack.c.l.b16 %v357
    %v396 = vunpack.c.l.b16 %v358
    %v397 = vunpack.c.l.b16 %v359
    %v398 = vunpack.c.l.b16 %v360
    %v399 = vunpack.c.l.b16 %v361
    %v400 = vunpack.c.l.b16 %v362
    %v401 = vunpack.c.l.b16 %v363
    %v402 = vunpack.c.l.b16 %v364
    %v403 = vunpack.c.l.b16 %v365
    %v404 = vunpack.c.l.b16 %v366
    %v405 = vunpack.c.l.b16 %v367
    %v406 = vunpack.c.l.b16 %v368
    %v407 = vpack.c.b16 %v392, %v391
    %v408 = vpack.c.b16 %v394, %v393
    %v409 = vpack.c.b16 %v396, %v395
    %v410 = vpack.c.b16 %v398, %v397
    %v411 = vpack.c.b16 %v400, %v399
    %v412 = vpack.c.b16 %v402, %v401
    %v413 = vpack.c.b16 %v404, %v403
    %v414 = vpack.c.b16 %v406, %v405
    %423 = vmatprep.subr.bf16.mxu0 0
    %424 = vmatpush1.bf16.msra.mxu0 %v414
    %425 = vmatprep.subr.bf16.mxu0 0
    %426 = vmatpush1.bf16.msra.mxu0 %v413
    %427 = vmatprep.subr.bf16.mxu0 0
    %428 = vmatpush1.bf16.msra.mxu0 %v412
    %429 = vmatprep.subr.bf16.mxu0 0
    %430 = vmatpush1.bf16.msra.mxu0 %v411
    %431 = vmatprep.subr.bf16.mxu0 0
    %432 = vmatpush1.bf16.msra.mxu0 %v410
    %433 = vmatprep.subr.bf16.mxu0 0
    %434 = vmatpush1.bf16.msra.mxu0 %v409
    %435 = vmatprep.subr.bf16.mxu0 0
    %436 = vmatpush1.bf16.msra.mxu0 %v408
    %437 = vmatprep.subr.bf16.mxu0 0
    %438 = vmatpush1.bf16.msra.mxu0 %v407
    %439 = vmatprep.subr.bf16.mxu0 0
    %440 = vmatpush2.bf16.msra.mxu0 0
    %441 = vmatprep.subr.bf16.mxu0 0
    %442 = vmatpush2.bf16.msra.mxu0 0
    %443 = vmatprep.subr.bf16.mxu0 0
    %444 = vmatpush2.bf16.msra.mxu0 0
    %445 = vmatprep.subr.bf16.mxu0 0
    %446 = vmatpush2.bf16.msra.mxu0 0
    %447 = vmatprep.subr.bf16.mxu0 0
    %448 = vmatpush2.bf16.msra.mxu0 0
    %449 = vmatprep.subr.bf16.mxu0 0
    %450 = vmatpush2.bf16.msra.mxu0 0
    %451 = vmatprep.subr.bf16.mxu0 0
    %452 = vmatpush2.bf16.msra.mxu0 0
    %453 = vmatprep.subr.bf16.mxu0 0
    %454 = vmatpush2.bf16.msra.mxu0 0
    %455 = vmatprep.mubr.bf16.mxu0 0
    %456 = vmatmul.mubr.bf16.gmra.mxu0 %v351
    %v457 = vpop.f32.mrf.mxu0
    %v458 = vadd.f32 %v374, %v457
    %v459 = vpop.f32.mrf.mxu0
    %v460 = vpop.f32.mrf.mxu0
    %v461 = vpop.f32.mrf.mxu0
    %462 = vdwg.mxu0
    %v463 = vld [vmem:[%s369 + $0x1] sm:$0x1]
    %v464 = vld [vmem:[%s369 + $0x2] sm:$0x1]
    %v465 = vrot.slane %v458, 4
    %v466 = vadd.f32 %v458, %v465
    %v467 = vrot.slane %v466, 2
    %v468 = vadd.f32 %v466, %v467
    %v469 = vrot.slane %v468, 1
    %v470 = vadd.f32 %v468, %v469
    %v471 = vmul.f32 %v470, %v174
    %v472 = vmul.f32 %v458, %v458
    %v473 = vrot.slane %v472, 4
    %v474 = vadd.f32 %v472, %v473
    %v475 = vrot.slane %v474, 2
    %v476 = vadd.f32 %v474, %v475
    %v477 = vrot.slane %v476, 1
    %v478 = vadd.f32 %v476, %v477
    %v479 = vmul.f32 %v478, %v174
    %v480 = vmul.f32 %v471, %v471
    %v481 = vsub.f32 %v479, %v480
    %v482 = vmax.f32 %v481, 0.0
    %v483 = vadd.f32 %v482, 1e-05
    %v484 = vrsqrt.pop %v483
    %v485 = vmul.f32 %v463, %v484
    %v486 = vmul.f32 %v471, %v485
    %v487 = vsub.f32 %v464, %v486
    %v488 = vlaneseq
    %v489 = vshrl.u32 %v488, 7
    %v490 = vsub.s32 0, %v489
    %v491 = vrot.slane %v485, %v490
    %v492 = vmul.f32 %v458, %v491
    %v493 = vlaneseq
    %v494 = vshrl.u32 %v493, 7
    %v495 = vsub.s32 0, %v494
    %v496 = vrot.slane %v487, %v495
    %v497 = vadd.f32 %v492, %v496
    %v498 = vmax.f32 %v497, 0.0
    %v499 = vpack.c.bf16 %v498, %v498
    %s500 = scalar_lea.vmem [#allocation5], 192
    %v501 = vld [vmem:[%s500] sm:$0xf]
    %v502 = vld [vmem:[%s500 + $0x4] sm:$0xf]
    %v503 = vld [vmem:[%s500 + $0x8] sm:$0xf]
    %v504 = vld [vmem:[%s500 + $0xc] sm:$0xf]
    %v505 = vld [vmem:[%s500 + $0x10] sm:$0xf]
    %v506 = vld [vmem:[%s500 + $0x14] sm:$0xf]
    %v507 = vld [vmem:[%s500 + $0x18] sm:$0xf]
    %v508 = vld [vmem:[%s500 + $0x1c] sm:$0xf]
    %v509 = vld [vmem:[%s500 + $0x20] sm:$0xf]
    %v510 = vld [vmem:[%s500 + $0x24] sm:$0xf]
    %v511 = vld [vmem:[%s500 + $0x28] sm:$0xf]
    %v512 = vld [vmem:[%s500 + $0x2c] sm:$0xf]
    %v513 = vld [vmem:[%s500 + $0x30] sm:$0xf]
    %v514 = vld [vmem:[%s500 + $0x34] sm:$0xf]
    %v515 = vld [vmem:[%s500 + $0x38] sm:$0xf]
    %v516 = vld [vmem:[%s500 + $0x3c] sm:$0xf]
    %s517 = scalar_lea.vmem [#allocation7], 24
    %v518 = vld [vmem:[%s517] sm:$0x1]
    %v519 = vlaneseq
    %v520 = vshrl.u32 %v519, 7
    %v521 = vsub.s32 0, %v520
    %v522 = vrot.slane %v518, %v521
    %v539 = vunpack.c.l.b16 %v501
    %v540 = vunpack.c.l.b16 %v502
    %v541 = vunpack.c.l.b16 %v503
    %v542 = vunpack.c.l.b16 %v504
    %v543 = vunpack.c.l.b16 %v505
    %v544 = vunpack.c.l.b16 %v506
    %v545 = vunpack.c.l.b16 %v507
    %v546 = vunpack.c.l.b16 %v508
    %v547 = vunpack.c.l.b16 %v509
    %v548 = vunpack.c.l.b16 %v510
    %v549 = vunpack.c.l.b16 %v511
    %v550 = vunpack.c.l.b16 %v512
    %v551 = vunpack.c.l.b16 %v513
    %v552 = vunpack.c.l.b16 %v514
    %v553 = vunpack.c.l.b16 %v515
    %v554 = vunpack.c.l.b16 %v516
    %v555 = vpack.c.b16 %v540, %v539
    %v556 = vpack.c.b16 %v542, %v541
    %v557 = vpack.c.b16 %v544, %v543
    %v558 = vpack.c.b16 %v546, %v545
    %v559 = vpack.c.b16 %v548, %v547
    %v560 = vpack.c.b16 %v550, %v549
    %v561 = vpack.c.b16 %v552, %v551
    %v562 = vpack.c.b16 %v554, %v553
    %571 = vmatprep.subr.bf16.mxu0 0
    %572 = vmatpush1.bf16.msra.mxu0 %v562
    %573 = vmatprep.subr.bf16.mxu0 0
    %574 = vmatpush1.bf16.msra.mxu0 %v561
    %575 = vmatprep.subr.bf16.mxu0 0
    %576 = vmatpush1.bf16.msra.mxu0 %v560
    %577 = vmatprep.subr.bf16.mxu0 0
    %578 = vmatpush1.bf16.msra.mxu0 %v559
    %579 = vmatprep.subr.bf16.mxu0 0
    %580 = vmatpush1.bf16.msra.mxu0 %v558
    %581 = vmatprep.subr.bf16.mxu0 0
    %582 = vmatpush1.bf16.msra.mxu0 %v557
    %583 = vmatprep.subr.bf16.mxu0 0
    %584 = vmatpush1.bf16.msra.mxu0 %v556
    %585 = vmatprep.subr.bf16.mxu0 0
    %586 = vmatpush1.bf16.msra.mxu0 %v555
    %587 = vmatprep.subr.bf16.mxu0 0
    %588 = vmatpush2.bf16.msra.mxu0 0
    %589 = vmatprep.subr.bf16.mxu0 0
    %590 = vmatpush2.bf16.msra.mxu0 0
    %591 = vmatprep.subr.bf16.mxu0 0
    %592 = vmatpush2.bf16.msra.mxu0 0
    %593 = vmatprep.subr.bf16.mxu0 0
    %594 = vmatpush2.bf16.msra.mxu0 0
    %595 = vmatprep.subr.bf16.mxu0 0
    %596 = vmatpush2.bf16.msra.mxu0 0
    %597 = vmatprep.subr.bf16.mxu0 0
    %598 = vmatpush2.bf16.msra.mxu0 0
    %599 = vmatprep.subr.bf16.mxu0 0
    %600 = vmatpush2.bf16.msra.mxu0 0
    %601 = vmatprep.subr.bf16.mxu0 0
    %602 = vmatpush2.bf16.msra.mxu0 0
    %603 = vmatprep.mubr.bf16.mxu0 0
    %604 = vmatmul.mubr.bf16.gmra.mxu0 %v499
    %v605 = vpop.f32.mrf.mxu0
    %v606 = vadd.f32 %v522, %v605
    %v607 = vpop.f32.mrf.mxu0
    %v608 = vpop.f32.mrf.mxu0
    %v609 = vpop.f32.mrf.mxu0
    %610 = vdwg.mxu0
    %611 = vst [vmem:[#allocation8] sm:$0xff] %v606
    // Predicated region
    $region26: #{tpu_custom_call.1} parent=1 // pred_check
      _
    $region27: #{tpu_custom_call.1} parent=1 // pred_check_branch
      %613 = sbr.rel (0) target = $region29
    $region28: #{tpu_custom_call.1} parent=1 // pred_region
      %s615 = ssub.s32 128, 128
      %616 = vsyncadd [#allocation4], %s615
      %s618 = sshll.u32 [#allocation8], 4
      %s619 = int_to_ptr.vmem [resolvable:$true] %s618
      %621 = dma.vmem_to_hbm [thread:$0]  %s619, 128, %s3, [#allocation4]
    $region29: #{tpu_custom_call.1} parent=1 // pred_fallthru
      _
    // Predicated region
    $region30: #{tpu_custom_call.1} parent=1 // pred_check
      _
    $region31: #{tpu_custom_call.1} parent=1 // pred_check_branch
      %623 = sbr.rel (0) target = $region33
    $region32: #{tpu_custom_call.1} parent=1 // pred_region
      %624 = dma.done [#allocation4], 128
    $region33: #{tpu_custom_call.1} parent=1 // pred_fallthru
      _
    %625 = vsyncpa [#allocation3], 1
    %626 = vsyncpa [#allocation6], 1
    %627 = vsyncpa [#allocation4], 1

</llo_original>
